<compile_context>
chip_gen: v6e
topology: v6e:2x2x1
jax: 0.10.0
libtpu: 0.0.40
codegen_flags: <defaults>
</compile_context>

<pallas_src>
import jax
import jax.numpy as jnp
from jax.experimental import pallas as pl
from jax.experimental.pallas import tpu as pltpu


def _round_up(n, m):
    return ((n + m - 1) // m) * m


def _cdiv(a, b):
    return -(-a // b)


def _vmem_budget_bytes():
    """Usable VMEM budget per chip generation, with 25% headroom.

    v5e/v6e: 128 MiB -> ~96 MiB budget; v7x: 64 MiB -> ~48 MiB budget.
    Falls back to the conservative (v7x-safe) 48 MiB if the query fails.
    """
    cap = 64 * 1024 * 1024
    try:
        cap = pltpu.get_tpu_info().vmem_capacity_bytes
    except Exception:
        pass
    return int(cap) * 3 // 4


def _make_kan_kernel(num_kernels, d_pad):
    K = num_kernels

    def kernel(x_ref, c_ref, s_ref, w_ref, b_ref, o_ref, kern_ref):
        # x_ref   : VMEM (B_tile, D_pad)        f32   (zero-padded input block)
        # c_ref   : SMEM (K,)                   f32   centers
        # s_ref   : SMEM (K,)                   f32   -1/(2*widths^2)
        # w_ref   : VMEM (K*D_pad, O_tile)      cdt   weights[o,d,k] -> row k*D_pad+d
        # b_ref   : VMEM (1, O_tile)            f32
        # o_ref   : VMEM (B_tile, O_tile)       f32
        # kern_ref: VMEM scratch (B_tile, K*D_pad) cdt  cached RBF activations

        # Recompute the RBF activations only when entering a new batch block.
        # The O axis (j) is innermost and "arbitrary", so the scratch persists
        # and is reused for every O block of the same batch block.
        @pl.when(pl.program_id(1) == 0)
        def _():
            x = x_ref[...]                                   # (B_tile, D_pad) f32
            for k in range(K):                               # static unroll, K small
                diff = x - c_ref[k]                          # SMEM scalar broadcast
                kern_ref[:, k * d_pad:(k + 1) * d_pad] = jnp.exp(
                    (diff * diff) * s_ref[k]).astype(kern_ref.dtype)

        # One fused MXU matmul over the K*D_pad contraction, f32 accumulation.
        acc = jnp.dot(kern_ref[...], w_ref[...],
                      preferred_element_type=jnp.float32)
        o_ref[...] = (acc + b_ref[...]).astype(o_ref.dtype)

    return kernel


def prepare_kan_params(weights, bias, centers, widths, *,
                       compute_dtype=jnp.bfloat16):
    """One-time parameter re-layout (hoist out of the per-call hot path).

    weights: (O, D, K), bias: (O,), centers/widths: (K,).
    The per-kernel stride along the contraction is padded to a multiple of 128
    lanes (D_pad) so the in-kernel activation replication is lane-aligned.
    Padded weight rows / output columns are zero, so they contribute nothing.
    """
    O, D, K = weights.shape
    D_pad = _round_up(D, 128)
    O_pad = _round_up(O, 128)
    KD = K * D_pad

    # weights[o, d, k] -> w[k*D_pad + d, o]  (matches the in-kernel layout).
    w = jnp.transpose(weights.astype(jnp.float32), (2, 1, 0))      # (K, D, O)
    w = jnp.pad(w, ((0, 0), (0, D_pad - D), (0, 0)))               # (K, D_pad, O)
    w = w.reshape(KD, O)
    w = jnp.pad(w, ((0, 0), (0, O_pad - O))).astype(compute_dtype)  # (KD, O_pad)

    bias_p = jnp.pad(bias.astype(jnp.float32), (0, O_pad - O)).reshape(1, O_pad)
    scales = -1.0 / (2.0 * jnp.square(widths.astype(jnp.float32)))   # (K,)

    return dict(
        w=w, bias=bias_p,
        centers=centers.astype(jnp.float32), scales=scales,
        D=D, D_pad=D_pad, K=K, O=O, O_pad=O_pad,
        compute_dtype=compute_dtype,
    )


def kan_layer_apply(x, params, *, b_tile_max=512, interpret=False):
    """Hot path: x (B, D) + pre-laid-out params -> (B, O) float32."""
    B, D = x.shape
    assert D == params["D"], "input_dim mismatch with prepared params"
    K = params["K"]
    D_pad = params["D_pad"]
    O = params["O"]
    O_pad = params["O_pad"]
    KD = K * D_pad
    compute_dtype = params["compute_dtype"]
    wbytes = jnp.dtype(compute_dtype).itemsize

    # ---- Batch tiling: near-equal blocks (multiples of 8 rows), bounded pad
    # waste for awkward B.  Force >= 2 batch blocks for large B so both
    # TensorCores get work on 2-TC chips (v7x); v5e/v6e simply pipeline them.
    B_pad8 = _round_up(B, 8)
    num_i = _cdiv(B_pad8, min(b_tile_max, B_pad8))
    if num_i == 1 and B_pad8 >= 512:
        num_i = 2
    B_tile = _round_up(_cdiv(B_pad8, num_i), 8)
    B_pad = B_tile * num_i

    # ---- Output tiling from an explicit VMEM footprint.  Prefer O_tile =
    # O_pad (grid_j == 1) so the weight block index is constant and the weight
    # slab is DMA'd from HBM exactly once.
    budget = _vmem_budget_bytes()

    def footprint(bt, ot):
        return (2 * bt * D_pad * 4          # x            (double-buffered)
                + 2 * KD * ot * wbytes      # weights      (double-buffered)
                + 2 * ot * 4                # bias         (double-buffered)
                + 2 * bt * ot * 4           # output       (double-buffered)
                + bt * KD * wbytes)         # cached RBF activations (scratch)

    def pick_o_tile(bt):
        # Largest 128-multiple divisor of O_pad whose footprint fits.
        for ot in range(O_pad, 127, -128):
            if O_pad % ot == 0 and footprint(bt, ot) <= budget:
                return ot
        return None

    O_tile = pick_o_tile(B_tile)
    while O_tile is None and B_tile > 8:
        num_i *= 2
        B_tile = _round_up(_cdiv(B_pad8, num_i), 8)
        B_pad = B_tile * num_i
        O_tile = pick_o_tile(B_tile)
    if O_tile is None:
        O_tile = 128  # last resort; extremely large KD*O only

    grid = (B_pad // B_tile, O_pad // O_tile)
    grid_i, grid_j = grid

    x_f32 = x.astype(jnp.float32)
    if (B_pad, D_pad) != (B, D):
        x_f32 = jnp.pad(x_f32, ((0, B_pad - B), (0, D_pad - D)))

    # Accurate traffic estimate: weights are re-read once per batch block only
    # when the O axis is tiled (grid_j > 1); otherwise they stay VMEM-resident.
    w_reads = grid_i if grid_j > 1 else 1
    cost = pl.CostEstimate(
        flops=2 * B_pad * KD * O_pad + 3 * B_pad * KD,
        transcendentals=B_pad * KD,
        bytes_accessed=(4 * B_pad * D_pad
                        + w_reads * KD * O_pad * wbytes
                        + 4 * O_pad + 8 * K
                        + 4 * B_pad * O_pad),
    )

    # NOTE: if profiling on v5e/v6e shows the weight DMA exposed when
    # grid_j > 1, pipeline_mode=pl.Buffered(3) on the weight BlockSpec hides
    # it; keep depth 2 on v7x (64 MiB VMEM).
    out = pl.pallas_call(
        _make_kan_kernel(K, D_pad),
        out_shape=jax.ShapeDtypeStruct((B_pad, O_pad), jnp.float32),
        grid=grid,
        in_specs=[
            pl.BlockSpec((B_tile, D_pad), lambda i, j: (i, 0)),       # x
            pl.BlockSpec(memory_space=pltpu.MemorySpace.SMEM),        # centers (K,)
            pl.BlockSpec(memory_space=pltpu.MemorySpace.SMEM),        # -1/(2w^2) (K,)
            pl.BlockSpec((KD, O_tile), lambda i, j: (0, j)),          # weights
            pl.BlockSpec((1, O_tile), lambda i, j: (0, j)),           # bias
        ],
        out_specs=pl.BlockSpec((B_tile, O_tile), lambda i, j: (i, j)),
        scratch_shapes=[pltpu.VMEM((B_tile, KD), compute_dtype)],
        compiler_params=pltpu.CompilerParams(
            # j must stay innermost + "arbitrary" so the cached activation
            # scratch legally persists across the O blocks of a batch block.
            dimension_semantics=("parallel", "arbitrary"),
            vmem_limit_bytes=budget,
        ),
        cost_estimate=cost,
        interpret=interpret,
    )(x_f32, params["centers"], params["scales"], params["w"], params["bias"])

    return out[:B, :O]


def kan_layer(x, weights, bias, centers, widths, *, compute_dtype=jnp.bfloat16):
    """Convenience wrapper: param prep (should be hoisted by callers) + apply."""
    params = prepare_kan_params(weights, bias, centers, widths,
                                compute_dtype=compute_dtype)
    return kan_layer_apply(x, params)


def kan_layer_ref(x, weights, bias, centers, widths):
    """Pure-JAX reference mirroring the PyTorch forward exactly."""
    x_expanded = x[:, :, None]                       # (B, D, 1)
    c = centers.reshape(1, 1, -1)
    w = widths.reshape(1, 1, -1)
    kernels = jnp.exp(-(x_expanded - c) ** 2 / (2.0 * w ** 2))     # (B, D, K)
    weighted = jnp.sum(kernels[:, None, :, :] * weights[None, :, :, :],
                       axis=(2, 3))                                # (B, O)
    return weighted + bias


if __name__ == "__main__":
    # Small shapes consistent with the module: (batch, input_dim) -> (batch, output_dim)
    B, D, O, K = 8, 32, 16, 4

    key = jax.random.PRNGKey(0)
    kx, kw = jax.random.split(key)

    x = jax.random.normal(kx, (B, D), dtype=jnp.float32)
    # Parameter init matching KANLayer.__init__:
    weights = jax.random.normal(kw, (O, D, K), dtype=jnp.float32)  # torch.randn
    bias = jnp.zeros((O,), dtype=jnp.float32)                      # torch.zeros
    centers = jnp.linspace(-1.0, 1.0, K, dtype=jnp.float32)        # torch.linspace
    widths = jnp.ones((K,), dtype=jnp.float32) * 0.1               # torch.ones*0.1

    ref = kan_layer_ref(x, weights, bias, centers, widths)

    # Strict f32 path: matches the PyTorch forward to 1e-4.
    params_f32 = prepare_kan_params(weights, bias, centers, widths,
                                    compute_dtype=jnp.float32)
    out_f32 = jax.block_until_ready(kan_layer_apply(x, params_f32))
    assert out_f32.shape == (B, O)
    assert jnp.allclose(out_f32, ref, atol=1e-4, rtol=1e-4), "f32 mismatch vs reference"

    # Default bf16-operand path (~3x MXU rate, half weight bytes), f32 accumulation.
    params_bf16 = prepare_kan_params(weights, bias, centers, widths,
                                     compute_dtype=jnp.bfloat16)
    out_bf16 = jax.block_until_ready(kan_layer_apply(x, params_bf16))
    assert out_bf16.shape == (B, O)
    assert jnp.allclose(out_bf16, ref, atol=1.5e-1, rtol=5e-2), "bf16 mismatch vs reference"

    print("KERNEL_OK")
</pallas_src>

<mosaic_0001>
module attributes {stable_mosaic.version = 11 : i64} {
  func.func @kernel(%arg0: i32, %arg1: i32, %arg2: memref<8x128xf32, #tpu.memory_space<vmem>>, %arg3: memref<4xf32, #tpu.memory_space<smem>>, %arg4: memref<4xf32, #tpu.memory_space<smem>>, %arg5: memref<512x128xf32, #tpu.memory_space<vmem>>, %arg6: memref<1x128xf32, #tpu.memory_space<vmem>>, %arg7: memref<8x128xf32, #tpu.memory_space<vmem>>, %arg8: memref<8x512xf32, #tpu.memory_space<vmem>>) attributes {dimension_semantics = [#tpu.dimension_semantics<parallel>, #tpu.dimension_semantics<arbitrary>], iteration_bounds = array<i64: 1, 1>, scalar_prefetch = 0 : i64, scratch_operands = 1 : i64, tpu.core_type = #tpu.core_type<tc>, window_params = [{transform_indices = @transform_0, window_bounds = array<i64: 8, 128>}, {transform_indices = @transform_1, window_bounds = array<i64: 4>}, {transform_indices = @transform_2, window_bounds = array<i64: 4>}, {transform_indices = @transform_3, window_bounds = array<i64: 512, 128>}, {transform_indices = @transform_4, window_bounds = array<i64: 1, 128>}, {transform_indices = @transform_5, window_bounds = array<i64: 8, 128>}]} {
    %c0_i32 = arith.constant 0 : i32
    %0 = arith.cmpi eq, %arg1, %c0_i32 : i32
    %1 = arith.extui %0 : i1 to i32
    %c0_i32_0 = arith.constant 0 : i32
    %2 = arith.cmpi ne, %1, %c0_i32_0 : i32
    scf.if %2 {
      %c0_8 = arith.constant 0 : index
      %c0_9 = arith.constant 0 : index
      %10 = vector.load %arg2[%c0_8, %c0_9] : memref<8x128xf32, #tpu.memory_space<vmem>>, vector<8x128xf32>
      %c0_10 = arith.constant 0 : index
      %11 = memref.load %arg3[%c0_10] : memref<4xf32, #tpu.memory_space<smem>>
      %12 = vector.broadcast %11 : f32 to vector<8x128xf32>
      %13 = arith.subf %10, %12 : vector<8x128xf32>
      %14 = arith.mulf %13, %13 : vector<8x128xf32>
      %c0_11 = arith.constant 0 : index
      %15 = memref.load %arg4[%c0_11] : memref<4xf32, #tpu.memory_space<smem>>
      %16 = vector.broadcast %15 : f32 to vector<8x128xf32>
      %17 = arith.mulf %14, %16 : vector<8x128xf32>
      %18 = math.exp %17 : vector<8x128xf32>
      %c0_12 = arith.constant 0 : index
      %c0_13 = arith.constant 0 : index
      %19 = vector.load %arg8[%c0_12, %c0_13] : memref<8x512xf32, #tpu.memory_space<vmem>>, vector<8x128xf32>
      tpu.vector_store %arg8[%c0_12, %c0_13], %18 {strides = array<i32>} : memref<8x512xf32, #tpu.memory_space<vmem>>, vector<8x128xf32>,
      %c1 = arith.constant 1 : index
      %20 = memref.load %arg3[%c1] : memref<4xf32, #tpu.memory_space<smem>>
      %21 = vector.broadcast %20 : f32 to vector<8x128xf32>
      %22 = arith.subf %10, %21 : vector<8x128xf32>
      %23 = arith.mulf %22, %22 : vector<8x128xf32>
      %c1_14 = arith.constant 1 : index
      %24 = memref.load %arg4[%c1_14] : memref<4xf32, #tpu.memory_space<smem>>
      %25 = vector.broadcast %24 : f32 to vector<8x128xf32>
      %26 = arith.mulf %23, %25 : vector<8x128xf32>
      %27 = math.exp %26 : vector<8x128xf32>
      %c0_15 = arith.constant 0 : index
      %c128 = arith.constant 128 : index
      %28 = vector.load %arg8[%c0_15, %c128] : memref<8x512xf32, #tpu.memory_space<vmem>>, vector<8x128xf32>
      tpu.vector_store %arg8[%c0_15, %c128], %27 {strides = array<i32>} : memref<8x512xf32, #tpu.memory_space<vmem>>, vector<8x128xf32>,
      %c2 = arith.constant 2 : index
      %29 = memref.load %arg3[%c2] : memref<4xf32, #tpu.memory_space<smem>>
      %30 = vector.broadcast %29 : f32 to vector<8x128xf32>
      %31 = arith.subf %10, %30 : vector<8x128xf32>
      %32 = arith.mulf %31, %31 : vector<8x128xf32>
      %c2_16 = arith.constant 2 : index
      %33 = memref.load %arg4[%c2_16] : memref<4xf32, #tpu.memory_space<smem>>
      %34 = vector.broadcast %33 : f32 to vector<8x128xf32>
      %35 = arith.mulf %32, %34 : vector<8x128xf32>
      %36 = math.exp %35 : vector<8x128xf32>
      %c0_17 = arith.constant 0 : index
      %c256 = arith.constant 256 : index
      %37 = vector.load %arg8[%c0_17, %c256] : memref<8x512xf32, #tpu.memory_space<vmem>>, vector<8x128xf32>
      tpu.vector_store %arg8[%c0_17, %c256], %36 {strides = array<i32>} : memref<8x512xf32, #tpu.memory_space<vmem>>, vector<8x128xf32>,
      %c3 = arith.constant 3 : index
      %38 = memref.load %arg3[%c3] : memref<4xf32, #tpu.memory_space<smem>>
      %39 = vector.broadcast %38 : f32 to vector<8x128xf32>
      %40 = arith.subf %10, %39 : vector<8x128xf32>
      %41 = arith.mulf %40, %40 : vector<8x128xf32>
      %c3_18 = arith.constant 3 : index
      %42 = memref.load %arg4[%c3_18] : memref<4xf32, #tpu.memory_space<smem>>
      %43 = vector.broadcast %42 : f32 to vector<8x128xf32>
      %44 = arith.mulf %41, %43 : vector<8x128xf32>
      %45 = math.exp %44 : vector<8x128xf32>
      %c0_19 = arith.constant 0 : index
      %c384 = arith.constant 384 : index
      %46 = vector.load %arg8[%c0_19, %c384] : memref<8x512xf32, #tpu.memory_space<vmem>>, vector<8x128xf32>
      tpu.vector_store %arg8[%c0_19, %c384], %45 {strides = array<i32>} : memref<8x512xf32, #tpu.memory_space<vmem>>, vector<8x128xf32>,
    } else {
    }
    %c0 = arith.constant 0 : index
    %c0_1 = arith.constant 0 : index
    %3 = vector.load %arg8[%c0, %c0_1] : memref<8x512xf32, #tpu.memory_space<vmem>>, vector<8x512xf32>
    %c0_2 = arith.constant 0 : index
    %c0_3 = arith.constant 0 : index
    %4 = vector.load %arg5[%c0_2, %c0_3] : memref<512x128xf32, #tpu.memory_space<vmem>>, vector<512x128xf32>
    %cst = arith.constant dense<0.000000e+00> : vector<8x128xf32>
    %5 = tpu.matmul %3, %4, %cst {dimension_numbers = #tpu.dot_dimension_numbers<[1], [0], [0], [1], [0, 0, 1, 1], [], []>} : vector<8x512xf32>, vector<512x128xf32>, vector<8x128xf32> -> vector<8x128xf32>
    %c0_4 = arith.constant 0 : index
    %c0_5 = arith.constant 0 : index
    %6 = vector.load %arg6[%c0_4, %c0_5] : memref<1x128xf32, #tpu.memory_space<vmem>>, vector<1x128xf32>
    %7 = vector.broadcast %6 : vector<1x128xf32> to vector<8x128xf32>
    %8 = arith.addf %5, %7 : vector<8x128xf32>
    %c0_6 = arith.constant 0 : index
    %c0_7 = arith.constant 0 : index
    %9 = vector.load %arg7[%c0_6, %c0_7] : memref<8x128xf32, #tpu.memory_space<vmem>>, vector<8x128xf32>
    tpu.vector_store %arg7[%c0_6, %c0_7], %8 {strides = array<i32>} : memref<8x128xf32, #tpu.memory_space<vmem>>, vector<8x128xf32>,
    return
  }
  func.func @transform_0(%arg0: i32, %arg1: i32) -> (i32, i32) {
    %c0_i32 = arith.constant 0 : i32
    %c0_i32_0 = arith.constant 0 : i32
    return %arg0, %c0_i32 : i32, i32
  }
  func.func @transform_1(%arg0: i32, %arg1: i32) -> i32 {
    %c0_i32 = arith.constant 0 : i32
    %c0_i32_0 = arith.constant 0 : i32
    return %c0_i32 : i32
  }
  func.func @transform_2(%arg0: i32, %arg1: i32) -> i32 {
    %c0_i32 = arith.constant 0 : i32
    %c0_i32_0 = arith.constant 0 : i32
    return %c0_i32 : i32
  }
  func.func @transform_3(%arg0: i32, %arg1: i32) -> (i32, i32) {
    %c0_i32 = arith.constant 0 : i32
    %c0_i32_0 = arith.constant 0 : i32
    return %c0_i32, %arg1 : i32, i32
  }
  func.func @transform_4(%arg0: i32, %arg1: i32) -> (i32, i32) {
    %c0_i32 = arith.constant 0 : i32
    %c0_i32_0 = arith.constant 0 : i32
    return %c0_i32, %arg1 : i32, i32
  }
  func.func @transform_5(%arg0: i32, %arg1: i32) -> (i32, i32) {
    %c0_i32 = arith.constant 0 : i32
    return %arg0, %arg1 : i32, i32
  }
}

</mosaic_0001>

<llo_original>
// kernel: tpu_custom_call.1
$region0: #{tpu_custom_call.1}
  #allocation0 [shape = 'u32[]', space=smem, size = 0x4, offset = 0x4, fixed_abs, tag = 'smem constant byte address 0x4 - core index']
  #allocation1 [shape = 'u32[144,128]{1,0:T(1,128)}', space=vmem, size = 0x12000, scoped, tag = 'internal scratch']
  #allocation2 [shape = 'f32[8,512]{1,0:T(8,128)}', space=vmem, size = 0x4000, scoped, tag = 'scratch operand']
  %s0 = inlined_call_operand.hbm [shape: f32[8,128], index: 0, kind: input, shape index: {}]
  %s1 = inlined_call_operand.vmem [shape: f32[4], index: 1, kind: input, shape index: {}]
  %s2 = inlined_call_operand.vmem [shape: f32[4], index: 2, kind: input, shape index: {}]
  %s3 = inlined_call_operand.hbm [shape: f32[512,128], index: 3, kind: input, shape index: {}]
  %s4 = inlined_call_operand.vmem [shape: f32[1,128], index: 4, kind: input, shape index: {}]
  %s5 = inlined_call_operand.hbm [shape: f32[8,128], index: 5, kind: output, shape index: {}]
  %s6 = sld [smem:[#allocation0]]
  $region50: #{tpu_custom_call.1} parent=0
    _
  %s8 = ssub.s32 1, %s6
  %s9 = scalar_select 0, %s8, %s6
  $region1: #{tpu_custom_call.1} parent=0
    #allocation3 [shape = 'u8[4096]{0}', space=vmem, size = 0x1000, scoped, tag = 'input window, operand 0, single buffered']
    #allocation4 [shape = 's32[1]{0}', space=sflag, size = 0x4, scoped, tag = 'scoped memory for tpu_custom_call.1']
    #allocation5 [shape = 's32[1]{0}', space=sflag, size = 0x4, scoped, tag = 'scoped memory for tpu_custom_call.1']
    #allocation6 [shape = 's32[1]{0}', space=sflag, size = 0x4, scoped, tag = 'scoped memory for tpu_custom_call.1']
    #allocation7 [shape = 'u8[512]{0}', space=smem, size = 0x200, scoped, tag = 'input window, operand 1, single buffered']
    #allocation8 [shape = 'u8[512]{0}', space=smem, size = 0x200, scoped, tag = 'input window, operand 2, single buffered']
    #allocation9 [shape = 's32[1]{0}', space=sflag, size = 0x4, scoped, tag = 'scoped memory for tpu_custom_call.1']
    #allocation10 [shape = 'u8[262144]{0}', space=vmem, size = 0x40000, scoped, tag = 'input window, operand 3, single buffered']
    #allocation11 [shape = 's32[1]{0}', space=sflag, size = 0x4, scoped, tag = 'scoped memory for tpu_custom_call.1']
    #allocation12 [shape = 'u8[4096]{0}', space=vmem, size = 0x1000, scoped, tag = 'output window, operand 0, single buffered']
    %10 = vsyncpa [#allocation4], 0
    %11 = vsyncpa [#allocation6], 0
    %12 = vsyncpa [#allocation9], 0
    %13 = vsyncpa [#allocation11], 0
    %14 = vsyncpa [#allocation5], 0
    // Predicated region
    $region2: #{tpu_custom_call.1} parent=1 // pred_check
      _
    $region3: #{tpu_custom_call.1} parent=1 // pred_check_branch
      %16 = sbr.rel (0) target = $region5
    $region4: #{tpu_custom_call.1} parent=1 // pred_region
      %s18 = ssub.s32 128, 128
      %19 = vsyncadd [#allocation4], %s18
      %s21 = sshll.u32 [#allocation3], 4
      %s22 = int_to_ptr.vmem [resolvable:$true] %s21
      %24 = dma.hbm_to_vmem [thread:$0]  %s0, 128, %s22, [#allocation4]
    $region5: #{tpu_custom_call.1} parent=1 // pred_fallthru
      _
    // Predicated region
    $region6: #{tpu_custom_call.1} parent=1 // pred_check
      _
    $region7: #{tpu_custom_call.1} parent=1 // pred_check_branch
      %26 = sbr.rel (0) target = $region9
    $region8: #{tpu_custom_call.1} parent=1 // pred_region
      %s28 = ssub.s32 16, 16
      %29 = vsyncadd [#allocation6], %s28
      %s31 = sshll.u32 %s1, 4
      %s32 = int_to_ptr.vmem [resolvable:$true] %s31
      %34 = dma.vmem_to_smem %s32, 16, [#allocation7], [#allocation6]
    $region9: #{tpu_custom_call.1} parent=1 // pred_fallthru
      _
    // Predicated region
    $region10: #{tpu_custom_call.1} parent=1 // pred_check
      _
    $region11: #{tpu_custom_call.1} parent=1 // pred_check_branch
      %36 = sbr.rel (0) target = $region13
    $region12: #{tpu_custom_call.1} parent=1 // pred_region
      %s38 = ssub.s32 16, 16
      %39 = vsyncadd [#allocation9], %s38
      %s41 = sshll.u32 %s2, 4
      %s42 = int_to_ptr.vmem [resolvable:$true] %s41
      %44 = dma.vmem_to_smem %s42, 16, [#allocation8], [#allocation9]
    $region13: #{tpu_custom_call.1} parent=1 // pred_fallthru
      _
    // Predicated region
    $region14: #{tpu_custom_call.1} parent=1 // pred_check
      _
    $region15: #{tpu_custom_call.1} parent=1 // pred_check_branch
      %46 = sbr.rel (0) target = $region17
    $region16: #{tpu_custom_call.1} parent=1 // pred_region
      %s48 = ssub.s32 8192, 8192
      %49 = vsyncadd [#allocation11], %s48
      %s50 = sshll.u32 [#allocation10], 4
      %s51 = int_to_ptr.vmem [resolvable:$true] %s50
      %56 = dma.hbm_to_vmem [thread:$0]  %s3, 8192, %s51, [#allocation11], 128, 128, 8
    $region17: #{tpu_custom_call.1} parent=1 // pred_fallthru
      _
    // Predicated region
    $region18: #{tpu_custom_call.1} parent=1 // pred_check
      _
    $region19: #{tpu_custom_call.1} parent=1 // pred_check_branch
      %58 = sbr.rel (0) target = $region21
    $region20: #{tpu_custom_call.1} parent=1 // pred_region
      _
    $region21: #{tpu_custom_call.1} parent=1 // pred_fallthru
      _
    // Predicated region
    $region22: #{tpu_custom_call.1} parent=1 // pred_check
      _
    $region23: #{tpu_custom_call.1} parent=1 // pred_check_branch
      %60 = sbr.rel (0) target = $region25
    $region24: #{tpu_custom_call.1} parent=1 // pred_region
      %61 = dma.done [#allocation4], 128
    $region25: #{tpu_custom_call.1} parent=1 // pred_fallthru
      _
    // Predicated region
    $region26: #{tpu_custom_call.1} parent=1 // pred_check
      _
    $region27: #{tpu_custom_call.1} parent=1 // pred_check_branch
      %63 = sbr.rel (0) target = $region29
    $region28: #{tpu_custom_call.1} parent=1 // pred_region
      %64 = dma.done [#allocation6], 16
    $region29: #{tpu_custom_call.1} parent=1 // pred_fallthru
      _
    // Predicated region
    $region30: #{tpu_custom_call.1} parent=1 // pred_check
      _
    $region31: #{tpu_custom_call.1} parent=1 // pred_check_branch
      %66 = sbr.rel (0) target = $region33
    $region32: #{tpu_custom_call.1} parent=1 // pred_region
      %67 = dma.done [#allocation9], 16
    $region33: #{tpu_custom_call.1} parent=1 // pred_fallthru
      _
    // Predicated region
    $region34: #{tpu_custom_call.1} parent=1 // pred_check
      _
    $region35: #{tpu_custom_call.1} parent=1 // pred_check_branch
      %69 = sbr.rel (0) target = $region37
    $region36: #{tpu_custom_call.1} parent=1 // pred_region
      %70 = dma.done [#allocation11], 8192
    $region37: #{tpu_custom_call.1} parent=1 // pred_fallthru
      _
    %71 = sfence
    %p72 = scmp.eq.s32.totalorder 0, 0
    // Predicated region
    $region38: #{tpu_custom_call.1} parent=1 // pred_check
      %p73 = pneg %p72
    $region39: #{tpu_custom_call.1} parent=1 // pred_check_branch
      %75 = sbr.rel (%p73) target = $region41
    $region40: #{tpu_custom_call.1} parent=1 // pred_region
      %v76 = vld [vmem:[#allocation3] sm:$0xff]
      %s77 = sld [smem:[#allocation7]]
      %v78 = vstv %s77
      %v79 = vsub.f32 %v76, %v78
      %v80 = vmul.f32 %v79, %v79
      %s81 = sld [smem:[#allocation8]]
      %v82 = vstv %s81
      %v83 = vmul.f32 %v80, %v82
      %v84 = vmul.f32 %v83, 1.442695
      %v85 = vpow.pop %v84
      %86 = vst [vmem:[#allocation2] sm:$0xff] %v85
      %s87 = sld [smem:[#allocation7 + $0x1]]
      %v88 = vstv %s87
      %v89 = vsub.f32 %v76, %v88
      %v90 = vmul.f32 %v89, %v89
      %s91 = sld [smem:[#allocation8 + $0x1]]
      %v92 = vstv %s91
      %v93 = vmul.f32 %v90, %v92
      %v94 = vmul.f32 %v93, 1.442695
      %v95 = vpow.pop %v94
      %96 = vst [vmem:[#allocation2 + $0x8] sm:$0xff] %v95
      %s97 = sld [smem:[#allocation7 + $0x2]]
      %v98 = vstv %s97
      %v99 = vsub.f32 %v76, %v98
      %v100 = vmul.f32 %v99, %v99
      %s101 = sld [smem:[#allocation8 + $0x2]]
      %v102 = vstv %s101
      %v103 = vmul.f32 %v100, %v102
      %v104 = vmul.f32 %v103, 1.442695
      %v105 = vpow.pop %v104
      %106 = vst [vmem:[#allocation2 + $0x10] sm:$0xff] %v105
      %s107 = sld [smem:[#allocation7 + $0x3]]
      %v108 = vstv %s107
      %v109 = vsub.f32 %v76, %v108
      %v110 = vmul.f32 %v109, %v109
      %s111 = sld [smem:[#allocation8 + $0x3]]
      %v112 = vstv %s111
      %v113 = vmul.f32 %v110, %v112
      %v114 = vmul.f32 %v113, 1.442695
      %v115 = vpow.pop %v114
      %116 = vst [vmem:[#allocation2 + $0x18] sm:$0xff] %v115
    $region41: #{tpu_custom_call.1} parent=1 // pred_fallthru
      _
    %v117 = vld [vmem:[#allocation2] sm:$0xff]
    %v118 = vld [vmem:[#allocation2 + $0x8] sm:$0xff]
    %v119 = vld [vmem:[#allocation2 + $0x10] sm:$0xff]
    %v120 = vld [vmem:[#allocation2 + $0x18] sm:$0xff]
    %v121 = vld [vmem:[#allocation10] sm:$0xff]
    %v122 = vld [vmem:[#allocation10 + $0x8] sm:$0xff]
    %v123 = vld [vmem:[#allocation10 + $0x10] sm:$0xff]
    %v124 = vld [vmem:[#allocation10 + $0x18] sm:$0xff]
    %v125 = vld [vmem:[#allocation10 + $0x20] sm:$0xff]
    %v126 = vld [vmem:[#allocation10 + $0x28] sm:$0xff]
    %v127 = vld [vmem:[#allocation10 + $0x30] sm:$0xff]
    %v128 = vld [vmem:[#allocation10 + $0x38] sm:$0xff]
    %v129 = vld [vmem:[#allocation10 + $0x40] sm:$0xff]
    %v130 = vld [vmem:[#allocation10 + $0x48] sm:$0xff]
    %v131 = vld [vmem:[#allocation10 + $0x50] sm:$0xff]
    %v132 = vld [vmem:[#allocation10 + $0x58] sm:$0xff]
    %v133 = vld [vmem:[#allocation10 + $0x60] sm:$0xff]
    %v134 = vld [vmem:[#allocation10 + $0x68] sm:$0xff]
    %v135 = vld [vmem:[#allocation10 + $0x70] sm:$0xff]
    %v136 = vld [vmem:[#allocation10 + $0x78] sm:$0xff]
    %v137 = vld [vmem:[#allocation10 + $0x80] sm:$0xff]
    %v138 = vld [vmem:[#allocation10 + $0x88] sm:$0xff]
    %v139 = vld [vmem:[#allocation10 + $0x90] sm:$0xff]
    %v140 = vld [vmem:[#allocation10 + $0x98] sm:$0xff]
    %v141 = vld [vmem:[#allocation10 + $0xa0] sm:$0xff]
    %v142 = vld [vmem:[#allocation10 + $0xa8] sm:$0xff]
    %v143 = vld [vmem:[#allocation10 + $0xb0] sm:$0xff]
    %v144 = vld [vmem:[#allocation10 + $0xb8] sm:$0xff]
    %v145 = vld [vmem:[#allocation10 + $0xc0] sm:$0xff]
    %v146 = vld [vmem:[#allocation10 + $0xc8] sm:$0xff]
    %v147 = vld [vmem:[#allocation10 + $0xd0] sm:$0xff]
    %v148 = vld [vmem:[#allocation10 + $0xd8] sm:$0xff]
    %v149 = vld [vmem:[#allocation10 + $0xe0] sm:$0xff]
    %v150 = vld [vmem:[#allocation10 + $0xe8] sm:$0xff]
    %v151 = vld [vmem:[#allocation10 + $0xf0] sm:$0xff]
    %v152 = vld [vmem:[#allocation10 + $0xf8] sm:$0xff]
    %v153 = vld [vmem:[#allocation10 + $0x100] sm:$0xff]
    %v154 = vld [vmem:[#allocation10 + $0x108] sm:$0xff]
    %v155 = vld [vmem:[#allocation10 + $0x110] sm:$0xff]
    %v156 = vld [vmem:[#allocation10 + $0x118] sm:$0xff]
    %v157 = vld [vmem:[#allocation10 + $0x120] sm:$0xff]
    %v158 = vld [vmem:[#allocation10 + $0x128] sm:$0xff]
    %v159 = vld [vmem:[#allocation10 + $0x130] sm:$0xff]
    %v160 = vld [vmem:[#allocation10 + $0x138] sm:$0xff]
    %v161 = vld [vmem:[#allocation10 + $0x140] sm:$0xff]
    %v162 = vld [vmem:[#allocation10 + $0x148] sm:$0xff]
    %v163 = vld [vmem:[#allocation10 + $0x150] sm:$0xff]
    %v164 = vld [vmem:[#allocation10 + $0x158] sm:$0xff]
    %v165 = vld [vmem:[#allocation10 + $0x160] sm:$0xff]
    %v166 = vld [vmem:[#allocation10 + $0x168] sm:$0xff]
    %v167 = vld [vmem:[#allocation10 + $0x170] sm:$0xff]
    %v168 = vld [vmem:[#allocation10 + $0x178] sm:$0xff]
    %v169 = vld [vmem:[#allocation10 + $0x180] sm:$0xff]
    %v170 = vld [vmem:[#allocation10 + $0x188] sm:$0xff]
    %v171 = vld [vmem:[#allocation10 + $0x190] sm:$0xff]
    %v172 = vld [vmem:[#allocation10 + $0x198] sm:$0xff]
    %v173 = vld [vmem:[#allocation10 + $0x1a0] sm:$0xff]
    %v174 = vld [vmem:[#allocation10 + $0x1a8] sm:$0xff]
    %v175 = vld [vmem:[#allocation10 + $0x1b0] sm:$0xff]
    %v176 = vld [vmem:[#allocation10 + $0x1b8] sm:$0xff]
    %v177 = vld [vmem:[#allocation10 + $0x1c0] sm:$0xff]
    %v178 = vld [vmem:[#allocation10 + $0x1c8] sm:$0xff]
    %v179 = vld [vmem:[#allocation10 + $0x1d0] sm:$0xff]
    %v180 = vld [vmem:[#allocation10 + $0x1d8] sm:$0xff]
    %v181 = vld [vmem:[#allocation10 + $0x1e0] sm:$0xff]
    %v182 = vld [vmem:[#allocation10 + $0x1e8] sm:$0xff]
    %v183 = vld [vmem:[#allocation10 + $0x1f0] sm:$0xff]
    %v184 = vld [vmem:[#allocation10 + $0x1f8] sm:$0xff]
    %v185 = vld [vmem:[%s4] sm:$0x1]
    %v187 = vlaneseq
    %v188 = vshrl.u32 %v187, 7
    %v189 = vsub.s32 0, %v188
    %v190 = vrot.slane %v185, %v189
    %192 = vmatprep.subr.mxu0 0.0
    %193 = vmatpush1.msra.mxu0 %v136
    %194 = vmatprep.subr.mxu0 0.0
    %195 = vmatpush1.msra.mxu0 %v135
    %196 = vmatprep.subr.mxu0 0.0
    %197 = vmatpush1.msra.mxu0 %v134
    %198 = vmatprep.subr.mxu0 0.0
    %199 = vmatpush1.msra.mxu0 %v133
    %200 = vmatprep.subr.mxu0 0.0
    %201 = vmatpush1.msra.mxu0 %v132
    %202 = vmatprep.subr.mxu0 0.0
    %203 = vmatpush1.msra.mxu0 %v131
    %204 = vmatprep.subr.mxu0 0.0
    %205 = vmatpush1.msra.mxu0 %v130
    %206 = vmatprep.subr.mxu0 0.0
    %207 = vmatpush1.msra.mxu0 %v129
    %208 = vmatprep.subr.mxu0 0.0
    %209 = vmatpush1.msra.mxu0 %v128
    %210 = vmatprep.subr.mxu0 0.0
    %211 = vmatpush1.msra.mxu0 %v127
    %212 = vmatprep.subr.mxu0 0.0
    %213 = vmatpush1.msra.mxu0 %v126
    %214 = vmatprep.subr.mxu0 0.0
    %215 = vmatpush1.msra.mxu0 %v125
    %216 = vmatprep.subr.mxu0 0.0
    %217 = vmatpush1.msra.mxu0 %v124
    %218 = vmatprep.subr.mxu0 0.0
    %219 = vmatpush1.msra.mxu0 %v123
    %220 = vmatprep.subr.mxu0 0.0
    %221 = vmatpush1.msra.mxu0 %v122
    %222 = vmatprep.subr.mxu0 0.0
    %223 = vmatpush1.msra.mxu0 %v121
    %224 = vmatprep.subr.mxu0 0.0
    %225 = vmatpush2.msra.mxu0 %v152
    %226 = vmatprep.subr.mxu0 0.0
    %227 = vmatpush2.msra.mxu0 %v151
    %228 = vmatprep.subr.mxu0 0.0
    %229 = vmatpush2.msra.mxu0 %v150
    %230 = vmatprep.subr.mxu0 0.0
    %231 = vmatpush2.msra.mxu0 %v149
    %232 = vmatprep.subr.mxu0 0.0
    %233 = vmatpush2.msra.mxu0 %v148
    %234 = vmatprep.subr.mxu0 0.0
    %235 = vmatpush2.msra.mxu0 %v147
    %236 = vmatprep.subr.mxu0 0.0
    %237 = vmatpush2.msra.mxu0 %v146
    %238 = vmatprep.subr.mxu0 0.0
    %239 = vmatpush2.msra.mxu0 %v145
    %240 = vmatprep.subr.mxu0 0.0
    %241 = vmatpush2.msra.mxu0 %v144
    %242 = vmatprep.subr.mxu0 0.0
    %243 = vmatpush2.msra.mxu0 %v143
    %244 = vmatprep.subr.mxu0 0.0
    %245 = vmatpush2.msra.mxu0 %v142
    %246 = vmatprep.subr.mxu0 0.0
    %247 = vmatpush2.msra.mxu0 %v141
    %248 = vmatprep.subr.mxu0 0.0
    %249 = vmatpush2.msra.mxu0 %v140
    %250 = vmatprep.subr.mxu0 0.0
    %251 = vmatpush2.msra.mxu0 %v139
    %252 = vmatprep.subr.mxu0 0.0
    %253 = vmatpush2.msra.mxu0 %v138
    %254 = vmatprep.subr.mxu0 0.0
    %255 = vmatpush2.msra.mxu0 %v137
    %256 = vmatprep.mubr.f32.mxu0 %v118
    %257 = vmatmul.mubr.f32.gmra.mxu0 %v117
    %v258 = vpop.f32.mrf.mxu0
    %v259 = vadd.f32 %v190, %v258
    %v260 = vpop.f32.mrf.mxu0
    %261 = vdwg.mxu0
    %262 = vmatprep.subr.mxu0 0.0
    %263 = vmatpush1.msra.mxu0 %v168
    %264 = vmatprep.subr.mxu0 0.0
    %265 = vmatpush1.msra.mxu0 %v167
    %266 = vmatprep.subr.mxu0 0.0
    %267 = vmatpush1.msra.mxu0 %v166
    %268 = vmatprep.subr.mxu0 0.0
    %269 = vmatpush1.msra.mxu0 %v165
    %270 = vmatprep.subr.mxu0 0.0
    %271 = vmatpush1.msra.mxu0 %v164
    %272 = vmatprep.subr.mxu0 0.0
    %273 = vmatpush1.msra.mxu0 %v163
    %274 = vmatprep.subr.mxu0 0.0
    %275 = vmatpush1.msra.mxu0 %v162
    %276 = vmatprep.subr.mxu0 0.0
    %277 = vmatpush1.msra.mxu0 %v161
    %278 = vmatprep.subr.mxu0 0.0
    %279 = vmatpush1.msra.mxu0 %v160
    %280 = vmatprep.subr.mxu0 0.0
    %281 = vmatpush1.msra.mxu0 %v159
    %282 = vmatprep.subr.mxu0 0.0
    %283 = vmatpush1.msra.mxu0 %v158
    %284 = vmatprep.subr.mxu0 0.0
    %285 = vmatpush1.msra.mxu0 %v157
    %286 = vmatprep.subr.mxu0 0.0
    %287 = vmatpush1.msra.mxu0 %v156
    %288 = vmatprep.subr.mxu0 0.0
    %289 = vmatpush1.msra.mxu0 %v155
    %290 = vmatprep.subr.mxu0 0.0
    %291 = vmatpush1.msra.mxu0 %v154
    %292 = vmatprep.subr.mxu0 0.0
    %293 = vmatpush1.msra.mxu0 %v153
    %294 = vmatprep.subr.mxu0 0.0
    %295 = vmatpush2.msra.mxu0 %v184
    %296 = vmatprep.subr.mxu0 0.0
    %297 = vmatpush2.msra.mxu0 %v183
    %298 = vmatprep.subr.mxu0 0.0
    %299 = vmatpush2.msra.mxu0 %v182
    %300 = vmatprep.subr.mxu0 0.0
    %301 = vmatpush2.msra.mxu0 %v181
    %302 = vmatprep.subr.mxu0 0.0
    %303 = vmatpush2.msra.mxu0 %v180
    %304 = vmatprep.subr.mxu0 0.0
    %305 = vmatpush2.msra.mxu0 %v179
    %306 = vmatprep.subr.mxu0 0.0
    %307 = vmatpush2.msra.mxu0 %v178
    %308 = vmatprep.subr.mxu0 0.0
    %309 = vmatpush2.msra.mxu0 %v177
    %310 = vmatprep.subr.mxu0 0.0
    %311 = vmatpush2.msra.mxu0 %v176
    %312 = vmatprep.subr.mxu0 0.0
    %313 = vmatpush2.msra.mxu0 %v175
    %314 = vmatprep.subr.mxu0 0.0
    %315 = vmatpush2.msra.mxu0 %v174
    %316 = vmatprep.subr.mxu0 0.0
    %317 = vmatpush2.msra.mxu0 %v173
    %318 = vmatprep.subr.mxu0 0.0
    %319 = vmatpush2.msra.mxu0 %v172
    %320 = vmatprep.subr.mxu0 0.0
    %321 = vmatpush2.msra.mxu0 %v171
    %322 = vmatprep.subr.mxu0 0.0
    %323 = vmatpush2.msra.mxu0 %v170
    %324 = vmatprep.subr.mxu0 0.0
    %325 = vmatpush2.msra.mxu0 %v169
    %326 = vmatprep.mubr.f32.mxu0 %v120
    %327 = vmatmul.mubr.f32.gmra.mxu0 %v119
    %v328 = vpop.f32.mrf.mxu0
    %v329 = vadd.f32 %v259, %v328
    %v330 = vpop.f32.mrf.mxu0
    %331 = vdwg.mxu0
    %332 = vst [vmem:[#allocation12] sm:$0xff] %v329
    // Predicated region
    $region42: #{tpu_custom_call.1} parent=1 // pred_check
      _
    $region43: #{tpu_custom_call.1} parent=1 // pred_check_branch
      %334 = sbr.rel (0) target = $region45
    $region44: #{tpu_custom_call.1} parent=1 // pred_region
      %s336 = ssub.s32 128, 128
      %337 = vsyncadd [#allocation5], %s336
      %s339 = sshll.u32 [#allocation12], 4
      %s340 = int_to_ptr.vmem [resolvable:$true] %s339
      %342 = dma.vmem_to_hbm [thread:$0]  %s340, 128, %s5, [#allocation5]
    $region45: #{tpu_custom_call.1} parent=1 // pred_fallthru
      _
    // Predicated region
    $region46: #{tpu_custom_call.1} parent=1 // pred_check
      _
    $region47: #{tpu_custom_call.1} parent=1 // pred_check_branch
      %344 = sbr.rel (0) target = $region49
    $region48: #{tpu_custom_call.1} parent=1 // pred_region
      %345 = dma.done [#allocation5], 128
    $region49: #{tpu_custom_call.1} parent=1 // pred_fallthru
      _
    %346 = vsyncpa [#allocation4], 1
    %347 = vsyncpa [#allocation11], 1
    %348 = vsyncpa [#allocation5], 1
    %349 = vsyncpa [#allocation6], 1
    %350 = vsyncpa [#allocation9], 1

</llo_original>
